<compile_context>
chip_gen: v5e
topology: v5e:2x2
jax: 0.10.0
libtpu: 0.0.40
codegen_flags: <defaults>
</compile_context>

<pallas_src>
import jax
import jax.numpy as jnp
from jax.experimental import pallas as pl
from jax.experimental.pallas import tpu as pltpu

HP = 128  # lane-dense padded hidden / channel width


def _round_up(x, m):
    return ((x + m - 1) // m) * m


# --------------------------- Pallas kernel ----------------------------------
def nnconv_sigmoid_kernel(src_ref, tgt_ref, ne_ref,            # scalar prefetch (SMEM)
                          ea_ref, x_ref,                        # resident edge attrs, node feats
                          w1_ref, b1_ref, w2cat_ref, b2p_ref,   # edge MLP (padded layout)
                          root_ref, bias_ref,                   # root linear + bias
                          o_ref,                                # (N, HP) output (resident)
                          acc_ref, xs_ref, msg_ref):            # VMEM scratch
    t = pl.program_id(0)
    n_tiles = pl.num_programs(0)
    te = msg_ref.shape[0]
    cin = w2cat_ref.shape[1] // HP          # true input channel count of this layer
    ne = ne_ref[0]                          # real edge count (read scalar early)
    base = pl.multiple_of(t * te, te)

    @pl.when(t == 0)
    def _init():
        acc_ref[...] = jnp.zeros_like(acc_ref)

    # ---- edge-attribute MLP on this tile (bf16 MXU, f32 accumulate) ----
    ea = ea_ref[pl.ds(base, te), :].astype(jnp.bfloat16)                     # (TE, 2)
    h1 = jnp.dot(ea, w1_ref[...], preferred_element_type=jnp.float32) + b1_ref[...]
    h1b = jnp.maximum(h1, 0.0).astype(jnp.bfloat16)                          # (TE, HP)

    # ---- gather x[src]: full-lane (1,128) row copies, 8-wide unrolled ----
    def gather_body(e, carry):
        s = src_ref[base + e]
        xs_ref[pl.ds(e, 1), :] = x_ref[pl.ds(s, 1), :]
        return carry
    jax.lax.fori_loop(0, te, gather_body, 0, unroll=8)
    xs = xs_ref[...]                                                          # (TE, HP) f32
    xsb = xs.astype(jnp.bfloat16)

    # ---- per-edge weight application, fused into one wide MXU matmul ----
    #   wflat[:, c*HP:(c+1)*HP] = per-edge weight columns for input channel c
    wflat = jnp.dot(h1b, w2cat_ref[...], preferred_element_type=jnp.float32)  # (TE, cin*HP)
    msg = jnp.dot(xsb, b2p_ref[...], preferred_element_type=jnp.float32)      # b2 bias term
    for c in range(cin):                                                      # VPU reduce over c
        msg = msg + xs[:, c:c + 1] * wflat[:, c * HP:(c + 1) * HP]
    msg_ref[...] = msg

    # ---- scatter-add into the resident (N, HP) accumulator ----
    # dynamic trip count skips the padded edge tail entirely (no mask multiply)
    trip = jnp.minimum(jnp.maximum(ne - base, 0), te)

    def scatter_body(e, carry):
        d = tgt_ref[base + e]
        acc_ref[pl.ds(d, 1), :] = acc_ref[pl.ds(d, 1), :] + msg_ref[pl.ds(e, 1), :]
        return carry
    jax.lax.fori_loop(0, trip, scatter_body, 0)

    # ---- finalize: root linear + bias + sigmoid (f32), lane-dense store ----
    @pl.when(t == n_tiles - 1)
    def _finalize():
        xb = x_ref[...].astype(jnp.bfloat16)
        out = (acc_ref[...]
               + jnp.dot(xb, root_ref[...], preferred_element_type=jnp.float32)
               + bias_ref[...])
        o_ref[...] = jax.nn.sigmoid(out)


# ------------------------------ wrappers -------------------------------------
def nnconv_layer(x_pad, src_pad, tgt_pad, n_edges, ea_pad, params, *, edge_tile):
    n = x_pad.shape[0]
    e_pad = ea_pad.shape[0]
    grid = e_pad // edge_tile
    cin = params["cin"]

    grid_spec = pltpu.PrefetchScalarGridSpec(
        num_scalar_prefetch=3,
        grid=(grid,),
        in_specs=[
            pl.BlockSpec((e_pad, 2),     lambda t, s, d, ne: (0, 0)),      # edge_attr (resident)
            pl.BlockSpec((n, HP),        lambda t, s, d, ne: (0, 0)),      # x (resident, lane-dense)
            pl.BlockSpec((2, HP),        lambda t, s, d, ne: (0, 0)),      # w1
            pl.BlockSpec((1, HP),        lambda t, s, d, ne: (0, 0)),      # b1
            pl.BlockSpec((HP, cin * HP), lambda t, s, d, ne: (0, 0)),      # w2 concatenated
            pl.BlockSpec((HP, HP),       lambda t, s, d, ne: (0, 0)),      # b2 (row c = channel c)
            pl.BlockSpec((HP, HP),       lambda t, s, d, ne: (0, 0)),      # root (zero rows >= cin)
            pl.BlockSpec((1, HP),        lambda t, s, d, ne: (0, 0)),      # bias
        ],
        out_specs=pl.BlockSpec((n, HP), lambda t, s, d, ne: (0, 0)),
        scratch_shapes=[
            pltpu.VMEM((n, HP), jnp.float32),          # scatter-add accumulator
            pltpu.VMEM((edge_tile, HP), jnp.float32),  # gathered x[src] (lane-dense)
            pltpu.VMEM((edge_tile, HP), jnp.float32),  # per-tile messages
        ],
    )

    # advisory cost estimate: edge MLP + fused per-edge weight matmul + root linear
    flops = int(2 * e_pad * HP * (2 + cin * HP + HP + cin) + 2 * n * HP * HP)
    bytes_acc = int(4 * (e_pad * 2 + 2 * n * HP + 2 * HP) + 8 * e_pad
                    + 2 * HP * (cin * HP + 2 * HP + 2))
    return pl.pallas_call(
        nnconv_sigmoid_kernel,
        out_shape=jax.ShapeDtypeStruct((n, HP), jnp.float32),
        grid_spec=grid_spec,
        compiler_params=pltpu.CompilerParams(
            dimension_semantics=("arbitrary",),
            vmem_limit_bytes=48 * 1024 * 1024),
        cost_estimate=pl.CostEstimate(flops=flops,
                                      transcendentals=int(n * HP),
                                      bytes_accessed=bytes_acc),
    )(src_pad, tgt_pad, n_edges, ea_pad, x_pad,
      params["w1"], params["b1"], params["w2cat"], params["b2p"],
      params["root"], params["bias"])


def gcn_forward(x, edge_index, edge_attr, layer_params, *, hidden_dim, edge_tile=512):
    e = edge_attr.shape[0]
    te = max(8, _round_up(min(edge_tile, _round_up(e, 8)), 8))
    e_pad = _round_up(e, te)
    pad = e_pad - e
    src_pad = jnp.pad(edge_index[0].astype(jnp.int32), (0, pad))
    tgt_pad = jnp.pad(edge_index[1].astype(jnp.int32), (0, pad))
    ea_pad = jnp.pad(edge_attr.astype(jnp.float32), ((0, pad), (0, 0)))
    n_edges = jnp.array([e], jnp.int32)

    n = x.shape[0]
    # lane-dense x: pad the feature dim to HP once; layers exchange (N, HP) directly.
    # NOTE: padded columns of intermediate layers are sigmoid(0)=0.5 and are never
    # read (zero-padded weight rows / per-channel loops use the true width).
    x_pad = jnp.zeros((n, HP), jnp.float32).at[:, :x.shape[1]].set(x.astype(jnp.float32))
    for p in layer_params:
        x_pad = nnconv_layer(x_pad, src_pad, tgt_pad, n_edges, ea_pad, p, edge_tile=te)
    return x_pad[:, :hidden_dim]


def prepare_params(raw_layers, hidden_dim):
    """Pad / restructure raw (PyTorch-shaped) params into the kernel layout (once)."""
    prepped = []
    h = hidden_dim
    for p in raw_layers:
        cin = p["root"].shape[0]
        w1 = jnp.zeros((2, HP), jnp.float32).at[:, :h].set(p["w1"])
        b1 = jnp.zeros((1, HP), jnp.float32).at[:, :h].set(p["b1"].reshape(1, h))
        # w2: (h, cin*h) with flat column index c*h + j  ->  w2cat: (HP, cin*HP)
        w2_blocks = jnp.pad(p["w2"].reshape(h, cin, h),
                            ((0, 0), (0, 0), (0, HP - h))).reshape(h, cin * HP)
        w2cat = jnp.zeros((HP, cin * HP), jnp.float32).at[:h, :].set(w2_blocks)
        b2p = jnp.zeros((HP, HP), jnp.float32).at[:cin, :h].set(p["b2"].reshape(cin, h))
        root = jnp.zeros((HP, HP), jnp.float32).at[:cin, :h].set(p["root"])
        bias = jnp.zeros((1, HP), jnp.float32).at[:, :h].set(p["bias"].reshape(1, h))
        prepped.append({
            "w1": w1.astype(jnp.bfloat16), "b1": b1,
            "w2cat": w2cat.astype(jnp.bfloat16), "b2p": b2p.astype(jnp.bfloat16),
            "root": root.astype(jnp.bfloat16), "bias": bias,
            "cin": cin,
        })
    return prepped


# ---------------- pure-JAX reference (module semantics, f32) ----------------
def gcn_reference(x, edge_index, edge_attr, layer_params):
    src, tgt = edge_index[0], edge_index[1]
    for p in layer_params:
        cin = x.shape[1]
        h = p["root"].shape[1]
        h1 = jnp.maximum(edge_attr @ p["w1"] + p["b1"], 0.0)
        wflat = h1 @ p["w2"] + p["b2"]
        W = wflat.reshape(-1, cin, h)
        msg = jnp.einsum("ec,ech->eh", x[src], W)
        agg = jnp.zeros((x.shape[0], h), jnp.float32).at[tgt].add(msg)
        x = jax.nn.sigmoid(agg + x @ p["root"] + p["bias"])
    return x


def init_params(key, in_dim, hidden_dim, num_layers):
    layer_params = []
    c_in = in_dim
    for _ in range(num_layers):
        key, k1, k2, k3, k4 = jax.random.split(key, 5)
        layer_params.append({
            "w1":   0.2 * jax.random.normal(k1, (2, hidden_dim), jnp.float32),
            "b1":   jnp.zeros((1, hidden_dim), jnp.float32),
            "w2":   0.2 * jax.random.normal(k2, (hidden_dim, c_in * hidden_dim), jnp.float32),
            "b2":   jnp.zeros((1, c_in * hidden_dim), jnp.float32),
            "root": 0.2 * jax.random.normal(k3, (c_in, hidden_dim), jnp.float32),
            "bias": 0.05 * jax.random.normal(k4, (1, hidden_dim), jnp.float32),
        })
        c_in = hidden_dim
    return layer_params


if __name__ == "__main__":
    # small shapes consistent with the module's forward
    N, IN_DIM, HIDDEN, NUM_LAYERS, E = 8, 4, 8, 2, 13
    # dropout arg of GCN.__init__ is never used in forward -> omitted

    key = jax.random.PRNGKey(0)
    key, kx, ke, ks, kt = jax.random.split(key, 5)
    x = jax.random.normal(kx, (N, IN_DIM), jnp.float32)
    edge_attr = jax.random.normal(ke, (E, 2), jnp.float32)
    edge_index = jnp.stack([
        jax.random.randint(ks, (E,), 0, N),   # sources
        jax.random.randint(kt, (E,), 0, N),   # targets
    ], axis=0).astype(jnp.int32)

    raw_params = init_params(jax.random.PRNGKey(42), IN_DIM, HIDDEN, NUM_LAYERS)
    params = prepare_params(raw_params, HIDDEN)

    # edge_tile=8 -> 2 edge tiles (exercises accumulation + dynamic padded-tail trip count)
    out = gcn_forward(x, edge_index, edge_attr, params, hidden_dim=HIDDEN, edge_tile=8)
    out = jax.block_until_ready(out)

    ref = gcn_reference(x, edge_index, edge_attr, raw_params)
    assert out.shape == (N, HIDDEN)
    max_err = float(jnp.max(jnp.abs(out - ref)))
    assert max_err < 3e-2, f"Pallas kernel mismatch vs reference (max abs err {max_err})"
    print("KERNEL_OK")
</pallas_src>

<mosaic_0001>
module attributes {stable_mosaic.version = 11 : i64} {
  func.func @nnconv_sigmoid_kernel(%arg0: i32, %arg1: memref<16xi32, #tpu.memory_space<smem>>, %arg2: memref<16xi32, #tpu.memory_space<smem>>, %arg3: memref<1xi32, #tpu.memory_space<smem>>, %arg4: memref<16x2xf32, #tpu.memory_space<vmem>>, %arg5: memref<8x128xf32, #tpu.memory_space<vmem>>, %arg6: memref<2x128xbf16, #tpu.memory_space<vmem>>, %arg7: memref<1x128xf32, #tpu.memory_space<vmem>>, %arg8: memref<128x512xbf16, #tpu.memory_space<vmem>>, %arg9: memref<128x128xbf16, #tpu.memory_space<vmem>>, %arg10: memref<128x128xbf16, #tpu.memory_space<vmem>>, %arg11: memref<1x128xf32, #tpu.memory_space<vmem>>, %arg12: memref<8x128xf32, #tpu.memory_space<vmem>>, %arg13: memref<8x128xf32, #tpu.memory_space<vmem>>, %arg14: memref<8x128xf32, #tpu.memory_space<vmem>>, %arg15: memref<8x128xf32, #tpu.memory_space<vmem>>) attributes {dimension_semantics = [#tpu.dimension_semantics<arbitrary>], iteration_bounds = array<i64: 2>, scalar_prefetch = 3 : i64, scratch_operands = 3 : i64, tpu.core_type = #tpu.core_type<tc>, window_params = [{pipeline_mode = #tpu.pipeline_mode<synchronous>, transform_indices = @transform_0, window_bounds = array<i64: 16, 2>}, {pipeline_mode = #tpu.pipeline_mode<synchronous>, transform_indices = @transform_1, window_bounds = array<i64: 8, 128>}, {pipeline_mode = #tpu.pipeline_mode<synchronous>, transform_indices = @transform_2, window_bounds = array<i64: 2, 128>}, {pipeline_mode = #tpu.pipeline_mode<synchronous>, transform_indices = @transform_3, window_bounds = array<i64: 1, 128>}, {pipeline_mode = #tpu.pipeline_mode<synchronous>, transform_indices = @transform_4, window_bounds = array<i64: 128, 512>}, {pipeline_mode = #tpu.pipeline_mode<synchronous>, transform_indices = @transform_5, window_bounds = array<i64: 128, 128>}, {pipeline_mode = #tpu.pipeline_mode<synchronous>, transform_indices = @transform_6, window_bounds = array<i64: 128, 128>}, {pipeline_mode = #tpu.pipeline_mode<synchronous>, transform_indices = @transform_7, window_bounds = array<i64: 1, 128>}, {pipeline_mode = #tpu.pipeline_mode<synchronous>, transform_indices = @transform_8, window_bounds = array<i64: 8, 128>}]} {
    %c0 = arith.constant 0 : index
    %0 = memref.load %arg3[%c0] : memref<1xi32, #tpu.memory_space<smem>>
    %c8_i32 = arith.constant 8 : i32
    %1 = arith.muli %arg0, %c8_i32 : i32
    %2 = tpu.assume_multiple %1, 8 : i32
    %c0_i32 = arith.constant 0 : i32
    %3 = arith.cmpi eq, %arg0, %c0_i32 : i32
    %4 = arith.extui %3 : i1 to i32
    %c0_i32_0 = arith.constant 0 : i32
    %5 = arith.cmpi ne, %4, %c0_i32_0 : i32
    scf.if %5 {
      %cst_42 = arith.constant 0.000000e+00 : f32
      %108 = vector.broadcast %cst_42 : f32 to vector<8x128xf32>
      %c0_43 = arith.constant 0 : index
      %c0_44 = arith.constant 0 : index
      %109 = vector.load %arg13[%c0_43, %c0_44] : memref<8x128xf32, #tpu.memory_space<vmem>>, vector<8x128xf32>
      tpu.vector_store %arg13[%c0_43, %c0_44], %108 {strides = array<i32>} : memref<8x128xf32, #tpu.memory_space<vmem>>, vector<8x128xf32>,
    } else {
    }
    %6 = arith.index_cast %2 : i32 to index
    %c0_1 = arith.constant 0 : index
    %7 = vector.load %arg4[%6, %c0_1] : memref<16x2xf32, #tpu.memory_space<vmem>>, vector<8x2xf32>
    %8 = arith.truncf %7 : vector<8x2xf32> to vector<8x2xbf16>
    %c0_2 = arith.constant 0 : index
    %c0_3 = arith.constant 0 : index
    %9 = vector.load %arg6[%c0_2, %c0_3] : memref<2x128xbf16, #tpu.memory_space<vmem>>, vector<2x128xbf16>
    %cst = arith.constant dense<0.000000e+00> : vector<8x128xf32>
    %10 = tpu.matmul %8, %9, %cst {dimension_numbers = #tpu.dot_dimension_numbers<[1], [0], [0], [1], [0, 0, 1, 1], [], []>} : vector<8x2xbf16>, vector<2x128xbf16>, vector<8x128xf32> -> vector<8x128xf32>
    %c0_4 = arith.constant 0 : index
    %c0_5 = arith.constant 0 : index
    %11 = vector.load %arg7[%c0_4, %c0_5] : memref<1x128xf32, #tpu.memory_space<vmem>>, vector<1x128xf32>
    %12 = vector.broadcast %11 : vector<1x128xf32> to vector<8x128xf32>
    %13 = arith.addf %10, %12 : vector<8x128xf32>
    %cst_6 = arith.constant 0.000000e+00 : f32
    %14 = vector.broadcast %cst_6 : f32 to vector<8x128xf32>
    %15 = arith.maximumf %13, %14 : vector<8x128xf32>
    %16 = arith.truncf %15 : vector<8x128xf32> to vector<8x128xbf16>
    %c0_i32_7 = arith.constant 0 : i32
    %17 = arith.addi %2, %c0_i32_7 : i32
    %18 = arith.index_cast %17 : i32 to index
    %19 = memref.load %arg1[%18] : memref<16xi32, #tpu.memory_space<smem>>
    %20 = arith.index_cast %19 : i32 to index
    %c0_8 = arith.constant 0 : index
    %21 = vector.load %arg5[%20, %c0_8] : memref<8x128xf32, #tpu.memory_space<vmem>>, vector<1x128xf32>
    %22 = arith.index_cast %c0_i32_7 : i32 to index
    %c0_9 = arith.constant 0 : index
    %23 = vector.load %arg14[%22, %c0_9] : memref<8x128xf32, #tpu.memory_space<vmem>>, vector<1x128xf32>
    tpu.vector_store %arg14[%22, %c0_9], %21 {strides = array<i32>} : memref<8x128xf32, #tpu.memory_space<vmem>>, vector<1x128xf32>,
    %c1_i32 = arith.constant 1 : i32
    %24 = arith.addi %2, %c1_i32 : i32
    %25 = arith.index_cast %24 : i32 to index
    %26 = memref.load %arg1[%25] : memref<16xi32, #tpu.memory_space<smem>>
    %27 = arith.index_cast %26 : i32 to index
    %c0_10 = arith.constant 0 : index
    %28 = vector.load %arg5[%27, %c0_10] : memref<8x128xf32, #tpu.memory_space<vmem>>, vector<1x128xf32>
    %29 = arith.index_cast %c1_i32 : i32 to index
    %c0_11 = arith.constant 0 : index
    %30 = vector.load %arg14[%29, %c0_11] : memref<8x128xf32, #tpu.memory_space<vmem>>, vector<1x128xf32>
    tpu.vector_store %arg14[%29, %c0_11], %28 {strides = array<i32>} : memref<8x128xf32, #tpu.memory_space<vmem>>, vector<1x128xf32>,
    %c2_i32 = arith.constant 2 : i32
    %31 = arith.addi %2, %c2_i32 : i32
    %32 = arith.index_cast %31 : i32 to index
    %33 = memref.load %arg1[%32] : memref<16xi32, #tpu.memory_space<smem>>
    %34 = arith.index_cast %33 : i32 to index
    %c0_12 = arith.constant 0 : index
    %35 = vector.load %arg5[%34, %c0_12] : memref<8x128xf32, #tpu.memory_space<vmem>>, vector<1x128xf32>
    %36 = arith.index_cast %c2_i32 : i32 to index
    %c0_13 = arith.constant 0 : index
    %37 = vector.load %arg14[%36, %c0_13] : memref<8x128xf32, #tpu.memory_space<vmem>>, vector<1x128xf32>
    tpu.vector_store %arg14[%36, %c0_13], %35 {strides = array<i32>} : memref<8x128xf32, #tpu.memory_space<vmem>>, vector<1x128xf32>,
    %c3_i32 = arith.constant 3 : i32
    %38 = arith.addi %2, %c3_i32 : i32
    %39 = arith.index_cast %38 : i32 to index
    %40 = memref.load %arg1[%39] : memref<16xi32, #tpu.memory_space<smem>>
    %41 = arith.index_cast %40 : i32 to index
    %c0_14 = arith.constant 0 : index
    %42 = vector.load %arg5[%41, %c0_14] : memref<8x128xf32, #tpu.memory_space<vmem>>, vector<1x128xf32>
    %43 = arith.index_cast %c3_i32 : i32 to index
    %c0_15 = arith.constant 0 : index
    %44 = vector.load %arg14[%43, %c0_15] : memref<8x128xf32, #tpu.memory_space<vmem>>, vector<1x128xf32>
    tpu.vector_store %arg14[%43, %c0_15], %42 {strides = array<i32>} : memref<8x128xf32, #tpu.memory_space<vmem>>, vector<1x128xf32>,
    %c4_i32 = arith.constant 4 : i32
    %45 = arith.addi %2, %c4_i32 : i32
    %46 = arith.index_cast %45 : i32 to index
    %47 = memref.load %arg1[%46] : memref<16xi32, #tpu.memory_space<smem>>
    %48 = arith.index_cast %47 : i32 to index
    %c0_16 = arith.constant 0 : index
    %49 = vector.load %arg5[%48, %c0_16] : memref<8x128xf32, #tpu.memory_space<vmem>>, vector<1x128xf32>
    %50 = arith.index_cast %c4_i32 : i32 to index
    %c0_17 = arith.constant 0 : index
    %51 = vector.load %arg14[%50, %c0_17] : memref<8x128xf32, #tpu.memory_space<vmem>>, vector<1x128xf32>
    tpu.vector_store %arg14[%50, %c0_17], %49 {strides = array<i32>} : memref<8x128xf32, #tpu.memory_space<vmem>>, vector<1x128xf32>,
    %c5_i32 = arith.constant 5 : i32
    %52 = arith.addi %2, %c5_i32 : i32
    %53 = arith.index_cast %52 : i32 to index
    %54 = memref.load %arg1[%53] : memref<16xi32, #tpu.memory_space<smem>>
    %55 = arith.index_cast %54 : i32 to index
    %c0_18 = arith.constant 0 : index
    %56 = vector.load %arg5[%55, %c0_18] : memref<8x128xf32, #tpu.memory_space<vmem>>, vector<1x128xf32>
    %57 = arith.index_cast %c5_i32 : i32 to index
    %c0_19 = arith.constant 0 : index
    %58 = vector.load %arg14[%57, %c0_19] : memref<8x128xf32, #tpu.memory_space<vmem>>, vector<1x128xf32>
    tpu.vector_store %arg14[%57, %c0_19], %56 {strides = array<i32>} : memref<8x128xf32, #tpu.memory_space<vmem>>, vector<1x128xf32>,
    %c6_i32 = arith.constant 6 : i32
    %59 = arith.addi %2, %c6_i32 : i32
    %60 = arith.index_cast %59 : i32 to index
    %61 = memref.load %arg1[%60] : memref<16xi32, #tpu.memory_space<smem>>
    %62 = arith.index_cast %61 : i32 to index
    %c0_20 = arith.constant 0 : index
    %63 = vector.load %arg5[%62, %c0_20] : memref<8x128xf32, #tpu.memory_space<vmem>>, vector<1x128xf32>
    %64 = arith.index_cast %c6_i32 : i32 to index
    %c0_21 = arith.constant 0 : index
    %65 = vector.load %arg14[%64, %c0_21] : memref<8x128xf32, #tpu.memory_space<vmem>>, vector<1x128xf32>
    tpu.vector_store %arg14[%64, %c0_21], %63 {strides = array<i32>} : memref<8x128xf32, #tpu.memory_space<vmem>>, vector<1x128xf32>,
    %c7_i32 = arith.constant 7 : i32
    %66 = arith.addi %2, %c7_i32 : i32
    %67 = arith.index_cast %66 : i32 to index
    %68 = memref.load %arg1[%67] : memref<16xi32, #tpu.memory_space<smem>>
    %69 = arith.index_cast %68 : i32 to index
    %c0_22 = arith.constant 0 : index
    %70 = vector.load %arg5[%69, %c0_22] : memref<8x128xf32, #tpu.memory_space<vmem>>, vector<1x128xf32>
    %71 = arith.index_cast %c7_i32 : i32 to index
    %c0_23 = arith.constant 0 : index
    %72 = vector.load %arg14[%71, %c0_23] : memref<8x128xf32, #tpu.memory_space<vmem>>, vector<1x128xf32>
    tpu.vector_store %arg14[%71, %c0_23], %70 {strides = array<i32>} : memref<8x128xf32, #tpu.memory_space<vmem>>, vector<1x128xf32>,
    %c8_i32_24 = arith.constant 8 : i32
    %c0_25 = arith.constant 0 : index
    %c0_26 = arith.constant 0 : index
    %73 = vector.load %arg14[%c0_25, %c0_26] : memref<8x128xf32, #tpu.memory_space<vmem>>, vector<8x128xf32>
    %74 = arith.truncf %73 : vector<8x128xf32> to vector<8x128xbf16>
    %c0_27 = arith.constant 0 : index
    %c0_28 = arith.constant 0 : index
    %75 = vector.load %arg8[%c0_27, %c0_28] : memref<128x512xbf16, #tpu.memory_space<vmem>>, vector<128x512xbf16>
    %cst_29 = arith.constant dense<0.000000e+00> : vector<8x512xf32>
    %76 = tpu.matmul %16, %75, %cst_29 {dimension_numbers = #tpu.dot_dimension_numbers<[1], [0], [0], [1], [0, 0, 1, 1], [], []>} : vector<8x128xbf16>, vector<128x512xbf16>, vector<8x512xf32> -> vector<8x512xf32>
    %c0_30 = arith.constant 0 : index
    %c0_31 = arith.constant 0 : index
    %77 = vector.load %arg9[%c0_30, %c0_31] : memref<128x128xbf16, #tpu.memory_space<vmem>>, vector<128x128xbf16>
    %cst_32 = arith.constant dense<0.000000e+00> : vector<8x128xf32>
    %78 = tpu.matmul %74, %77, %cst_32 {dimension_numbers = #tpu.dot_dimension_numbers<[1], [0], [0], [1], [0, 0, 1, 1], [], []>} : vector<8x128xbf16>, vector<128x128xbf16>, vector<8x128xf32> -> vector<8x128xf32>
    %79 = vector.extract_strided_slice %73 {offsets = [0, 0], sizes = [8, 1], strides = [1, 1]} : vector<8x128xf32> to vector<8x1xf32>
    %80 = vector.extract_strided_slice %76 {offsets = [0, 0], sizes = [8, 128], strides = [1, 1]} : vector<8x512xf32> to vector<8x128xf32>
    %81 = vector.broadcast %79 : vector<8x1xf32> to vector<8x128xf32>
    %82 = arith.mulf %81, %80 : vector<8x128xf32>
    %83 = arith.addf %78, %82 : vector<8x128xf32>
    %84 = vector.extract_strided_slice %73 {offsets = [0, 1], sizes = [8, 1], strides = [1, 1]} : vector<8x128xf32> to vector<8x1xf32>
    %85 = vector.extract_strided_slice %76 {offsets = [0, 128], sizes = [8, 128], strides = [1, 1]} : vector<8x512xf32> to vector<8x128xf32>
    %86 = vector.broadcast %84 : vector<8x1xf32> to vector<8x128xf32>
    %87 = arith.mulf %86, %85 : vector<8x128xf32>
    %88 = arith.addf %83, %87 : vector<8x128xf32>
    %89 = vector.extract_strided_slice %73 {offsets = [0, 2], sizes = [8, 1], strides = [1, 1]} : vector<8x128xf32> to vector<8x1xf32>
    %90 = vector.extract_strided_slice %76 {offsets = [0, 256], sizes = [8, 128], strides = [1, 1]} : vector<8x512xf32> to vector<8x128xf32>
    %91 = vector.broadcast %89 : vector<8x1xf32> to vector<8x128xf32>
    %92 = arith.mulf %91, %90 : vector<8x128xf32>
    %93 = arith.addf %88, %92 : vector<8x128xf32>
    %94 = vector.extract_strided_slice %73 {offsets = [0, 3], sizes = [8, 1], strides = [1, 1]} : vector<8x128xf32> to vector<8x1xf32>
    %95 = vector.extract_strided_slice %76 {offsets = [0, 384], sizes = [8, 128], strides = [1, 1]} : vector<8x512xf32> to vector<8x128xf32>
    %96 = vector.broadcast %94 : vector<8x1xf32> to vector<8x128xf32>
    %97 = arith.mulf %96, %95 : vector<8x128xf32>
    %98 = arith.addf %93, %97 : vector<8x128xf32>
    %c0_33 = arith.constant 0 : index
    %c0_34 = arith.constant 0 : index
    %99 = vector.load %arg15[%c0_33, %c0_34] : memref<8x128xf32, #tpu.memory_space<vmem>>, vector<8x128xf32>
    tpu.vector_store %arg15[%c0_33, %c0_34], %98 {strides = array<i32>} : memref<8x128xf32, #tpu.memory_space<vmem>>, vector<8x128xf32>,
    %100 = arith.subi %0, %2 : i32
    %c0_i32_35 = arith.constant 0 : i32
    %101 = arith.maxsi %100, %c0_i32_35 : i32
    %c8_i32_36 = arith.constant 8 : i32
    %102 = arith.minsi %101, %c8_i32_36 : i32
    %c0_i32_37 = arith.constant 0 : i32
    %c0_i32_38 = arith.constant 0 : i32
    %103 = arith.subi %102, %c0_i32_38 : i32
    %104 = arith.addi %c0_i32_38, %103 : i32
    %c1_i32_39 = arith.constant 1 : i32
    scf.for %arg16 = %c0_i32_38 to %104 step %c1_i32_39  : i32 {
      %108 = arith.addi %2, %arg16 : i32
      %109 = arith.index_cast %108 : i32 to index
      %110 = memref.load %arg2[%109] : memref<16xi32, #tpu.memory_space<smem>>
      %111 = arith.index_cast %110 : i32 to index
      %c0_42 = arith.constant 0 : index
      %112 = vector.load %arg13[%111, %c0_42] : memref<8x128xf32, #tpu.memory_space<vmem>>, vector<1x128xf32>
      %113 = arith.index_cast %arg16 : i32 to index
      %c0_43 = arith.constant 0 : index
      %114 = vector.load %arg15[%113, %c0_43] : memref<8x128xf32, #tpu.memory_space<vmem>>, vector<1x128xf32>
      %115 = arith.addf %112, %114 : vector<1x128xf32>
      %116 = arith.index_cast %110 : i32 to index
      %c0_44 = arith.constant 0 : index
      %117 = vector.load %arg13[%116, %c0_44] : memref<8x128xf32, #tpu.memory_space<vmem>>, vector<1x128xf32>
      tpu.vector_store %arg13[%116, %c0_44], %115 {strides = array<i32>} : memref<8x128xf32, #tpu.memory_space<vmem>>, vector<1x128xf32>,
    }
    %c1_i32_40 = arith.constant 1 : i32
    %105 = arith.cmpi eq, %arg0, %c1_i32_40 : i32
    %106 = arith.extui %105 : i1 to i32
    %c0_i32_41 = arith.constant 0 : i32
    %107 = arith.cmpi ne, %106, %c0_i32_41 : i32
    scf.if %107 {
      %c0_42 = arith.constant 0 : index
      %c0_43 = arith.constant 0 : index
      %108 = vector.load %arg5[%c0_42, %c0_43] : memref<8x128xf32, #tpu.memory_space<vmem>>, vector<8x128xf32>
      %109 = arith.truncf %108 : vector<8x128xf32> to vector<8x128xbf16>
      %c0_44 = arith.constant 0 : index
      %c0_45 = arith.constant 0 : index
      %110 = vector.load %arg13[%c0_44, %c0_45] : memref<8x128xf32, #tpu.memory_space<vmem>>, vector<8x128xf32>
      %c0_46 = arith.constant 0 : index
      %c0_47 = arith.constant 0 : index
      %111 = vector.load %arg10[%c0_46, %c0_47] : memref<128x128xbf16, #tpu.memory_space<vmem>>, vector<128x128xbf16>
      %cst_48 = arith.constant dense<0.000000e+00> : vector<8x128xf32>
      %112 = tpu.matmul %109, %111, %cst_48 {dimension_numbers = #tpu.dot_dimension_numbers<[1], [0], [0], [1], [0, 0, 1, 1], [], []>} : vector<8x128xbf16>, vector<128x128xbf16>, vector<8x128xf32> -> vector<8x128xf32>
      %113 = arith.addf %110, %112 : vector<8x128xf32>
      %c0_49 = arith.constant 0 : index
      %c0_50 = arith.constant 0 : index
      %114 = vector.load %arg11[%c0_49, %c0_50] : memref<1x128xf32, #tpu.memory_space<vmem>>, vector<1x128xf32>
      %115 = vector.broadcast %114 : vector<1x128xf32> to vector<8x128xf32>
      %116 = arith.addf %113, %115 : vector<8x128xf32>
      %117 = arith.negf %116 : vector<8x128xf32>
      %118 = math.exp %117 : vector<8x128xf32>
      %cst_51 = arith.constant 1.000000e+00 : f32
      %119 = vector.broadcast %cst_51 : f32 to vector<8x128xf32>
      %120 = arith.addf %119, %118 : vector<8x128xf32>
      %121 = arith.divf %119, %120 : vector<8x128xf32>
      %c0_52 = arith.constant 0 : index
      %c0_53 = arith.constant 0 : index
      %122 = vector.load %arg12[%c0_52, %c0_53] : memref<8x128xf32, #tpu.memory_space<vmem>>, vector<8x128xf32>
      tpu.vector_store %arg12[%c0_52, %c0_53], %121 {strides = array<i32>} : memref<8x128xf32, #tpu.memory_space<vmem>>, vector<8x128xf32>,
    } else {
    }
    return
  }
  func.func @transform_0(%arg0: i32, %arg1: memref<16xi32, #tpu.memory_space<smem>>, %arg2: memref<16xi32, #tpu.memory_space<smem>>, %arg3: memref<1xi32, #tpu.memory_space<smem>>) -> (i32, i32) {
    %c0_i32 = arith.constant 0 : i32
    %c0_i32_0 = arith.constant 0 : i32
    %c0_i32_1 = arith.constant 0 : i32
    return %c0_i32, %c0_i32_0 : i32, i32
  }
  func.func @transform_1(%arg0: i32, %arg1: memref<16xi32, #tpu.memory_space<smem>>, %arg2: memref<16xi32, #tpu.memory_space<smem>>, %arg3: memref<1xi32, #tpu.memory_space<smem>>) -> (i32, i32) {
    %c0_i32 = arith.constant 0 : i32
    %c0_i32_0 = arith.constant 0 : i32
    %c0_i32_1 = arith.constant 0 : i32
    return %c0_i32, %c0_i32_0 : i32, i32
  }
  func.func @transform_2(%arg0: i32, %arg1: memref<16xi32, #tpu.memory_space<smem>>, %arg2: memref<16xi32, #tpu.memory_space<smem>>, %arg3: memref<1xi32, #tpu.memory_space<smem>>) -> (i32, i32) {
    %c0_i32 = arith.constant 0 : i32
    %c0_i32_0 = arith.constant 0 : i32
    %c0_i32_1 = arith.constant 0 : i32
    return %c0_i32, %c0_i32_0 : i32, i32
  }
  func.func @transform_3(%arg0: i32, %arg1: memref<16xi32, #tpu.memory_space<smem>>, %arg2: memref<16xi32, #tpu.memory_space<smem>>, %arg3: memref<1xi32, #tpu.memory_space<smem>>) -> (i32, i32) {
    %c0_i32 = arith.constant 0 : i32
    %c0_i32_0 = arith.constant 0 : i32
    %c0_i32_1 = arith.constant 0 : i32
    return %c0_i32, %c0_i32_0 : i32, i32
  }
  func.func @transform_4(%arg0: i32, %arg1: memref<16xi32, #tpu.memory_space<smem>>, %arg2: memref<16xi32, #tpu.memory_space<smem>>, %arg3: memref<1xi32, #tpu.memory_space<smem>>) -> (i32, i32) {
    %c0_i32 = arith.constant 0 : i32
    %c0_i32_0 = arith.constant 0 : i32
    %c0_i32_1 = arith.constant 0 : i32
    return %c0_i32, %c0_i32_0 : i32, i32
  }
  func.func @transform_5(%arg0: i32, %arg1: memref<16xi32, #tpu.memory_space<smem>>, %arg2: memref<16xi32, #tpu.memory_space<smem>>, %arg3: memref<1xi32, #tpu.memory_space<smem>>) -> (i32, i32) {
    %c0_i32 = arith.constant 0 : i32
    %c0_i32_0 = arith.constant 0 : i32
    %c0_i32_1 = arith.constant 0 : i32
    return %c0_i32, %c0_i32_0 : i32, i32
  }
  func.func @transform_6(%arg0: i32, %arg1: memref<16xi32, #tpu.memory_space<smem>>, %arg2: memref<16xi32, #tpu.memory_space<smem>>, %arg3: memref<1xi32, #tpu.memory_space<smem>>) -> (i32, i32) {
    %c0_i32 = arith.constant 0 : i32
    %c0_i32_0 = arith.constant 0 : i32
    %c0_i32_1 = arith.constant 0 : i32
    return %c0_i32, %c0_i32_0 : i32, i32
  }
  func.func @transform_7(%arg0: i32, %arg1: memref<16xi32, #tpu.memory_space<smem>>, %arg2: memref<16xi32, #tpu.memory_space<smem>>, %arg3: memref<1xi32, #tpu.memory_space<smem>>) -> (i32, i32) {
    %c0_i32 = arith.constant 0 : i32
    %c0_i32_0 = arith.constant 0 : i32
    %c0_i32_1 = arith.constant 0 : i32
    return %c0_i32, %c0_i32_0 : i32, i32
  }
  func.func @transform_8(%arg0: i32, %arg1: memref<16xi32, #tpu.memory_space<smem>>, %arg2: memref<16xi32, #tpu.memory_space<smem>>, %arg3: memref<1xi32, #tpu.memory_space<smem>>) -> (i32, i32) {
    %c0_i32 = arith.constant 0 : i32
    %c0_i32_0 = arith.constant 0 : i32
    %c0_i32_1 = arith.constant 0 : i32
    return %c0_i32, %c0_i32_0 : i32, i32
  }
}

</mosaic_0001>

<llo_original>
// kernel: tpu_custom_call.1
$region0: #{tpu_custom_call.1}
  #allocation0 [shape = 'u32[]', space=smem, size = 0x4, offset = 0x4, fixed_abs, tag = 'smem constant byte address 0x4 - core index']
  #allocation1 [shape = 'u32[72,128]{1,0:T(1,128)}', space=vmem, size = 0x9000, scoped, tag = 'internal scratch']
  #allocation2 [shape = 'f32[8,128]{1,0:T(8,128)}', space=vmem, size = 0x1000, scoped, tag = 'scratch operand']
  #allocation3 [shape = 'f32[8,128]{1,0:T(8,128)}', space=vmem, size = 0x1000, scoped, tag = 'scratch operand']
  #allocation4 [shape = 'f32[8,128]{1,0:T(8,128)}', space=vmem, size = 0x1000, scoped, tag = 'scratch operand']
  #allocation5 [shape = 's32[1]{0}', space=sflag, size = 0x4, scoped, tag = 'scoped memory for tpu_custom_call.1']
  #allocation6 [shape = 'u8[512]{0}', space=smem, size = 0x200, scoped, tag = 'prefetched SMEM operand 0']
  #allocation7 [shape = 'u8[512]{0}', space=smem, size = 0x200, scoped, tag = 'prefetched SMEM operand 1']
  #allocation8 [shape = 's32[1]{0:T(128)S(6)}', space=smem, size = 0x200, scoped, tag = 'prefetched SMEM operand 2']
  %s0 = inlined_call_operand.vmem [shape: s32[16], index: 0, kind: input, shape index: {}]
  %s1 = inlined_call_operand.vmem [shape: s32[16], index: 1, kind: input, shape index: {}]
  %s2 = inlined_call_operand.<no memory space> [shape: s32[1], index: 2, kind: input, shape index: {}]
  %s3 = inlined_call_operand.vmem [shape: f32[16,2], index: 3, kind: input, shape index: {}]
  %s4 = inlined_call_operand.vmem [shape: f32[8,128], index: 4, kind: input, shape index: {}]
  %s5 = inlined_call_operand.vmem [shape: bf16[2,128], index: 5, kind: input, shape index: {}]
  %s6 = inlined_call_operand.vmem [shape: f32[1,128], index: 6, kind: input, shape index: {}]
  %s7 = inlined_call_operand.hbm [shape: bf16[128,512], index: 7, kind: input, shape index: {}]
  %s8 = inlined_call_operand.hbm [shape: bf16[128,128], index: 8, kind: input, shape index: {}]
  %s9 = inlined_call_operand.hbm [shape: bf16[128,128], index: 9, kind: input, shape index: {}]
  %s10 = inlined_call_operand.vmem [shape: f32[1,128], index: 10, kind: input, shape index: {}]
  %s11 = inlined_call_operand.hbm [shape: f32[8,128], index: 11, kind: output, shape index: {}]
  %s12 = sld [smem:[#allocation0]]
  $region92: #{tpu_custom_call.1} parent=0
    _
  %s14 = ssub.s32 1, %s12
  %s15 = scalar_select 0, %s14, %s12
  %s17 = sshll.u32 %s0, 4
  %s18 = int_to_ptr.vmem [resolvable:$true] %s17
  %20 = dma.vmem_to_smem %s18, 16, [#allocation6], [#allocation5]
  %s22 = sshll.u32 %s1, 4
  %s23 = int_to_ptr.vmem [resolvable:$true] %s22
  %25 = dma.vmem_to_smem %s23, 16, [#allocation7], [#allocation5]
  %26 = sst [smem:[#allocation8]] %s2
  %28 = dma.done [#allocation5], 32
  %29 = sfence
  $region1: #{tpu_custom_call.1} parent=0
    #allocation9 [shape = 'u8[131072]{0}', space=vmem, size = 0x20000, scoped, tag = 'input window, operand 7, single buffered']
    #allocation10 [shape = 's32[2]{0}', space=sflag, size = 0x8, scoped, tag = 'scoped memory for tpu_custom_call.1']
    #allocation11 [shape = 's32[2]{0}', space=sflag, size = 0x8, scoped, tag = 'scoped memory for tpu_custom_call.1']
    #allocation12 [shape = 'u8[32768]{0}', space=vmem, size = 0x8000, scoped, tag = 'input window, operand 8, single buffered']
    #allocation13 [shape = 's32[1]{0}', space=sflag, size = 0x4, scoped, tag = 'scoped memory for tpu_custom_call.1']
    #allocation14 [shape = 'u8[32768]{0}', space=vmem, size = 0x8000, scoped, tag = 'input window, operand 9, single buffered']
    #allocation15 [shape = 'u8[4096]{0}', space=vmem, size = 0x1000, scoped, tag = 'output window, operand 0, single buffered']
    %30 = vsyncpa [#allocation10], 0
    %31 = vsyncpa [#allocation13], 0
    %32 = vsyncpa [#allocation11], 0
    loop: start=0, step=1, limit=4
    $region2: #{tpu_custom_call.1} parent=1 // loop_pre_header
      _
    $region3: #{tpu_custom_call.1} parent=1 // loop_header
      %s34 = sphi 0, %s38
      %p35 = scmp.ge.s32.totalorder %s34, 4
      %s42 = sphi 0, %s42
      %s44 = sphi 0, %s42
      %s45 = sphi 0, %s44
      %s59 = sphi 0, %s45
      %s63 = sphi 0, %s63
      %s65 = sphi 0, %s63
      %s66 = sphi 0, %s65
      %s80 = sphi 0, %s66
      %s84 = sphi 0, %s84
      %s86 = sphi 0, %s84
      %s87 = sphi 0, %s86
      %s101 = sphi 0, %s87
      %s105 = sphi 0, %s105
      %s107 = sphi 0, %s105
      %s108 = sphi 0, %s107
      %s122 = sphi 0, %s108
      %s126 = sphi 0, %s126
      %s128 = sphi 0, %s126
      %s129 = sphi 0, %s128
      %s143 = sphi 0, %s129
      %s147 = sphi 0, %s147
      %s149 = sphi 0, %s147
      %s150 = sphi 0, %s149
      %s164 = sphi 0, %s150
      %s168 = sphi 0, %s168
      %s170 = sphi 0, %s168
      %s171 = sphi 0, %s170
      %s185 = sphi 0, %s171
      %s189 = sphi 0, %s189
      %s191 = sphi 0, %s189
      %s192 = sphi 0, %s191
      %s206 = sphi 0, %s192
      %s210 = sphi 0, %s210
      %s212 = sphi 0, %s210
      %s213 = sphi 0, %s212
      %s227 = sphi 0, %s213
    $region4: #{tpu_custom_call.1} parent=1 // loop_header_branch
      %37 = sbr.rel (%p35) target = $region8
    $region5: #{tpu_custom_call.1} parent=1 // loop_body
      %s39 = ssub.s32 %s34, 1
      %s40 = ssub.s32 %s34, 2
      %s41 = sadd.s32 %s34, 1
      %s43 = sadd.s32 %s42, 1
      %p46 = scmp.eq.s32.totalorder %s34, 1
      %p47 = scmp.ne.s32.totalorder %s42, %s44
      %p48 = scmp.eq.s32.totalorder %s34, 0
      %p49 = por %p47, %p48
      %p50 = scmp.ne.s32.totalorder %s42, %s44
      %p51 = scmp.eq.s32.totalorder %s39, 1
      %p52 = por %p50, %p51
      %p53 = scmp.ne.s32.totalorder %s44, %s45
      %p54 = scmp.eq.s32.totalorder %s39, 0
      %p55 = por %p53, %p54
      %p56 = scmp.ne.s32.totalorder %s44, %s45
      %p57 = scmp.eq.s32.totalorder %s40, 1
      %p58 = por %p56, %p57
      %p60 = scmp.ne.s32.totalorder %s45, %s59
      %p61 = scmp.eq.s32.totalorder %s40, 0
      %p62 = por %p60, %p61
      %s64 = sadd.s32 %s63, 1
      %p67 = scmp.eq.s32.totalorder %s34, 1
      %p68 = scmp.ne.s32.totalorder %s63, %s65
      %p69 = scmp.eq.s32.totalorder %s34, 0
      %p70 = por %p68, %p69
      %p71 = scmp.ne.s32.totalorder %s63, %s65
      %p72 = scmp.eq.s32.totalorder %s39, 1
      %p73 = por %p71, %p72
      %p74 = scmp.ne.s32.totalorder %s65, %s66
      %p75 = scmp.eq.s32.totalorder %s39, 0
      %p76 = por %p74, %p75
      %p77 = scmp.ne.s32.totalorder %s65, %s66
      %p78 = scmp.eq.s32.totalorder %s40, 1
      %p79 = por %p77, %p78
      %p81 = scmp.ne.s32.totalorder %s66, %s80
      %p82 = scmp.eq.s32.totalorder %s40, 0
      %p83 = por %p81, %p82
      %s85 = sadd.s32 %s84, 1
      %p88 = scmp.eq.s32.totalorder %s34, 1
      %p89 = scmp.ne.s32.totalorder %s84, %s86
      %p90 = scmp.eq.s32.totalorder %s34, 0
      %p91 = por %p89, %p90
      %p92 = scmp.ne.s32.totalorder %s84, %s86
      %p93 = scmp.eq.s32.totalorder %s39, 1
      %p94 = por %p92, %p93
      %p95 = scmp.ne.s32.totalorder %s86, %s87
      %p96 = scmp.eq.s32.totalorder %s39, 0
      %p97 = por %p95, %p96
      %p98 = scmp.ne.s32.totalorder %s86, %s87
      %p99 = scmp.eq.s32.totalorder %s40, 1
      %p100 = por %p98, %p99
      %p102 = scmp.ne.s32.totalorder %s87, %s101
      %p103 = scmp.eq.s32.totalorder %s40, 0
      %p104 = por %p102, %p103
      %s106 = sadd.s32 %s105, 1
      %p109 = scmp.eq.s32.totalorder %s34, 1
      %p110 = scmp.ne.s32.totalorder %s105, %s107
      %p111 = scmp.eq.s32.totalorder %s34, 0
      %p112 = por %p110, %p111
      %p113 = scmp.ne.s32.totalorder %s105, %s107
      %p114 = scmp.eq.s32.totalorder %s39, 1
      %p115 = por %p113, %p114
      %p116 = scmp.ne.s32.totalorder %s107, %s108
      %p117 = scmp.eq.s32.totalorder %s39, 0
      %p118 = por %p116, %p117
      %p119 = scmp.ne.s32.totalorder %s107, %s108
      %p120 = scmp.eq.s32.totalorder %s40, 1
      %p121 = por %p119, %p120
      %p123 = scmp.ne.s32.totalorder %s108, %s122
      %p124 = scmp.eq.s32.totalorder %s40, 0
      %p125 = por %p123, %p124
      %s127 = sadd.s32 %s126, 1
      %p130 = scmp.eq.s32.totalorder %s34, 1
      %p131 = scmp.ne.s32.totalorder %s126, %s128
      %p132 = scmp.eq.s32.totalorder %s34, 0
      %p133 = por %p131, %p132
      %p134 = scmp.ne.s32.totalorder %s126, %s128
      %p135 = scmp.eq.s32.totalorder %s39, 1
      %p136 = por %p134, %p135
      %p137 = scmp.ne.s32.totalorder %s128, %s129
      %p138 = scmp.eq.s32.totalorder %s39, 0
      %p139 = por %p137, %p138
      %p140 = scmp.ne.s32.totalorder %s128, %s129
      %p141 = scmp.eq.s32.totalorder %s40, 1
      %p142 = por %p140, %p141
      %p144 = scmp.ne.s32.totalorder %s129, %s143
      %p145 = scmp.eq.s32.totalorder %s40, 0
      %p146 = por %p144, %p145
      %s148 = sadd.s32 %s147, 1
      %p151 = scmp.eq.s32.totalorder %s34, 1
      %p152 = scmp.ne.s32.totalorder %s147, %s149
      %p153 = scmp.eq.s32.totalorder %s34, 0
      %p154 = por %p152, %p153
      %p155 = scmp.ne.s32.totalorder %s147, %s149
      %p156 = scmp.eq.s32.totalorder %s39, 1
      %p157 = por %p155, %p156
      %p158 = scmp.ne.s32.totalorder %s149, %s150
      %p159 = scmp.eq.s32.totalorder %s39, 0
      %p160 = por %p158, %p159
      %p161 = scmp.ne.s32.totalorder %s149, %s150
      %p162 = scmp.eq.s32.totalorder %s40, 1
      %p163 = por %p161, %p162
      %p165 = scmp.ne.s32.totalorder %s150, %s164
      %p166 = scmp.eq.s32.totalorder %s40, 0
      %p167 = por %p165, %p166
      %s169 = sadd.s32 %s168, 1
      %p172 = scmp.eq.s32.totalorder %s34, 1
      %p173 = scmp.ne.s32.totalorder %s168, %s170
      %p174 = scmp.eq.s32.totalorder %s34, 0
      %p175 = por %p173, %p174
      %p176 = scmp.ne.s32.totalorder %s168, %s170
      %p177 = scmp.eq.s32.totalorder %s39, 1
      %p178 = por %p176, %p177
      %p179 = scmp.ne.s32.totalorder %s170, %s171
      %p180 = scmp.eq.s32.totalorder %s39, 0
      %p181 = por %p179, %p180
      %p182 = scmp.ne.s32.totalorder %s170, %s171
      %p183 = scmp.eq.s32.totalorder %s40, 1
      %p184 = por %p182, %p183
      %p186 = scmp.ne.s32.totalorder %s171, %s185
      %p187 = scmp.eq.s32.totalorder %s40, 0
      %p188 = por %p186, %p187
      %s190 = sadd.s32 %s189, 1
      %p193 = scmp.eq.s32.totalorder %s34, 1
      %p194 = scmp.ne.s32.totalorder %s189, %s191
      %p195 = scmp.eq.s32.totalorder %s34, 0
      %p196 = por %p194, %p195
      %p197 = scmp.ne.s32.totalorder %s189, %s191
      %p198 = scmp.eq.s32.totalorder %s39, 1
      %p199 = por %p197, %p198
      %p200 = scmp.ne.s32.totalorder %s191, %s192
      %p201 = scmp.eq.s32.totalorder %s39, 0
      %p202 = por %p200, %p201
      %p203 = scmp.ne.s32.totalorder %s191, %s192
      %p204 = scmp.eq.s32.totalorder %s40, 1
      %p205 = por %p203, %p204
      %p207 = scmp.ne.s32.totalorder %s192, %s206
      %p208 = scmp.eq.s32.totalorder %s40, 0
      %p209 = por %p207, %p208
      %s211 = sadd.s32 %s210, 1
      %p214 = scmp.eq.s32.totalorder %s34, 1
      %p215 = scmp.ne.s32.totalorder %s210, %s212
      %p216 = scmp.eq.s32.totalorder %s34, 0
      %p217 = por %p215, %p216
      %p218 = scmp.ne.s32.totalorder %s210, %s212
      %p219 = scmp.eq.s32.totalorder %s39, 1
      %p220 = por %p218, %p219
      %p221 = scmp.ne.s32.totalorder %s212, %s213
      %p222 = scmp.eq.s32.totalorder %s39, 0
      %p223 = por %p221, %p222
      %p224 = scmp.ne.s32.totalorder %s212, %s213
      %p225 = scmp.eq.s32.totalorder %s40, 1
      %p226 = por %p224, %p225
      %p228 = scmp.ne.s32.totalorder %s213, %s227
      %p229 = scmp.eq.s32.totalorder %s40, 0
      %p230 = por %p228, %p229
      %p231 = scmp.le.s32.totalorder 1, %s34
      %p232 = scmp.lt.s32.totalorder %s34, 3
      %p233 = pnand %p231, %p232
      %p234 = pneg %p233
      // Predicated region
      $region9: #{tpu_custom_call.1} parent=5 // pred_check
        _
      $region10: #{tpu_custom_call.1} parent=5 // pred_check_branch
        %236 = sbr.rel (%p233) target = $region12
      $region11: #{tpu_custom_call.1} parent=5 // pred_region
        %s237 = ssub.s32 %s34, 1
        // Predicated region
        $region13: #{tpu_custom_call.1} parent=11 // pred_check
          %p238 = pneg %p55
        $region14: #{tpu_custom_call.1} parent=11 // pred_check_branch
          %240 = sbr.rel (%p238) target = $region16
        $region15: #{tpu_custom_call.1} parent=11 // pred_region
          _
        $region16: #{tpu_custom_call.1} parent=11 // pred_fallthru
          _
        // Predicated region
        $region17: #{tpu_custom_call.1} parent=11 // pred_check
          %p241 = pneg %p76
        $region18: #{tpu_custom_call.1} parent=11 // pred_check_branch
          %243 = sbr.rel (%p241) target = $region20
        $region19: #{tpu_custom_call.1} parent=11 // pred_region
          _
        $region20: #{tpu_custom_call.1} parent=11 // pred_fallthru
          _
        // Predicated region
        $region21: #{tpu_custom_call.1} parent=11 // pred_check
          %p244 = pneg %p97
        $region22: #{tpu_custom_call.1} parent=11 // pred_check_branch
          %246 = sbr.rel (%p244) target = $region24
        $region23: #{tpu_custom_call.1} parent=11 // pred_region
          _
        $region24: #{tpu_custom_call.1} parent=11 // pred_fallthru
          _
        // Predicated region
        $region25: #{tpu_custom_call.1} parent=11 // pred_check
          %p247 = pneg %p118
        $region26: #{tpu_custom_call.1} parent=11 // pred_check_branch
          %249 = sbr.rel (%p247) target = $region28
        $region27: #{tpu_custom_call.1} parent=11 // pred_region
          _
        $region28: #{tpu_custom_call.1} parent=11 // pred_fallthru
          _
        // Predicated region
        $region29: #{tpu_custom_call.1} parent=11 // pred_check
          %p250 = pneg %p139
        $region30: #{tpu_custom_call.1} parent=11 // pred_check_branch
          %252 = sbr.rel (%p250) target = $region32
        $region31: #{tpu_custom_call.1} parent=11 // pred_region
          %254 = vsyncadd [#allocation10], 0
          %s255 = sshll.u32 %s7, 4
          %s256 = int_to_ptr.hbm [resolvable:$true] %s255
          %s257 = sshll.u32 [#allocation9], 4
          %s258 = int_to_ptr.vmem [resolvable:$true] %s257
          %263 = dma.hbm_to_vmem [thread:$0]  %s256, 4096, %s258, [#allocation10], 256, 256, 16
        $region32: #{tpu_custom_call.1} parent=11 // pred_fallthru
          _
        // Predicated region
        $region33: #{tpu_custom_call.1} parent=11 // pred_check
          %p264 = pneg %p160
        $region34: #{tpu_custom_call.1} parent=11 // pred_check_branch
          %266 = sbr.rel (%p264) target = $region36
        $region35: #{tpu_custom_call.1} parent=11 // pred_region
          %268 = vsyncadd [#allocation13], 0
          %s269 = sshll.u32 %s8, 4
          %s270 = int_to_ptr.hbm [resolvable:$true] %s269
          %s271 = sshll.u32 [#allocation12], 4
          %s272 = int_to_ptr.vmem [resolvable:$true] %s271
          %277 = dma.hbm_to_vmem [thread:$0]  %s270, 1024, %s272, [#allocation13], 64, 64, 4
        $region36: #{tpu_custom_call.1} parent=11 // pred_fallthru
          _
        // Predicated region
        $region37: #{tpu_custom_call.1} parent=11 // pred_check
          %p278 = pneg %p181
        $region38: #{tpu_custom_call.1} parent=11 // pred_check_branch
          %280 = sbr.rel (%p278) target = $region40
        $region39: #{tpu_custom_call.1} parent=11 // pred_region
          %282 = vsyncadd [#allocation13], 0
          %s283 = sshll.u32 %s9, 4
          %s284 = int_to_ptr.hbm [resolvable:$true] %s283
          %s285 = sshll.u32 [#allocation14], 4
          %s286 = int_to_ptr.vmem [resolvable:$true] %s285
          %291 = dma.hbm_to_vmem [thread:$0]  %s284, 1024, %s286, [#allocation13], 64, 64, 4
        $region40: #{tpu_custom_call.1} parent=11 // pred_fallthru
          _
        // Predicated region
        $region41: #{tpu_custom_call.1} parent=11 // pred_check
          %p292 = pneg %p202
        $region42: #{tpu_custom_call.1} parent=11 // pred_check_branch
          %294 = sbr.rel (%p292) target = $region44
        $region43: #{tpu_custom_call.1} parent=11 // pred_region
          _
        $region44: #{tpu_custom_call.1} parent=11 // pred_fallthru
          _
      $region12: #{tpu_custom_call.1} parent=5 // pred_fallthru
        _
      %p295 = scmp.lt.s32.totalorder %s34, 2
      // Predicated region
      $region45: #{tpu_custom_call.1} parent=5 // pred_check
        %p296 = pneg %p295
      $region46: #{tpu_custom_call.1} parent=5 // pred_check_branch
        %298 = sbr.rel (%p296) target = $region48
      $region47: #{tpu_custom_call.1} parent=5 // pred_region
        _
      $region48: #{tpu_custom_call.1} parent=5 // pred_fallthru
        _
      %p299 = scmp.le.s32.totalorder 1, %s34
      %p300 = scmp.lt.s32.totalorder %s34, 3
      %p301 = pnand %p299, %p300
      %p302 = pneg %p301
      // Predicated region
      $region49: #{tpu_custom_call.1} parent=5 // pred_check
        _
      $region50: #{tpu_custom_call.1} parent=5 // pred_check_branch
        %304 = sbr.rel (%p301) target = $region52
      $region51: #{tpu_custom_call.1} parent=5 // pred_region
        %s305 = ssub.s32 %s34, 1
        // Predicated region
        $region53: #{tpu_custom_call.1} parent=51 // pred_check
          %p306 = pneg %p139
        $region54: #{tpu_custom_call.1} parent=51 // pred_check_branch
          %308 = sbr.rel (%p306) target = $region56
        $region55: #{tpu_custom_call.1} parent=51 // pred_region
          %310 = dma.done [#allocation10], 4096
        $region56: #{tpu_custom_call.1} parent=51 // pred_fallthru
          _
        // Predicated region
        $region57: #{tpu_custom_call.1} parent=51 // pred_check
          %p311 = pneg %p160
        $region58: #{tpu_custom_call.1} parent=51 // pred_check_branch
          %313 = sbr.rel (%p311) target = $region60
        $region59: #{tpu_custom_call.1} parent=51 // pred_region
          %315 = dma.done [#allocation13], 1024
        $region60: #{tpu_custom_call.1} parent=51 // pred_fallthru
          _
        // Predicated region
        $region61: #{tpu_custom_call.1} parent=51 // pred_check
          %p316 = pneg %p181
        $region62: #{tpu_custom_call.1} parent=51 // pred_check_branch
          %318 = sbr.rel (%p316) target = $region64
        $region63: #{tpu_custom_call.1} parent=51 // pred_region
          %320 = dma.done [#allocation13], 1024
        $region64: #{tpu_custom_call.1} parent=51 // pred_fallthru
          _
        %p321 = pneg %p55
        %p322 = pneg %p52
        %p323 = pneg %p76
        %p324 = pneg %p73
        %p325 = pneg %p97
        %p326 = pneg %p94
        %p327 = pneg %p118
        %p328 = pneg %p115
        %p329 = pneg %p139
        %p330 = pneg %p136
        %p331 = pneg %p160
        %p332 = pneg %p157
        %p333 = pneg %p181
        %p334 = pneg %p178
        %p335 = pneg %p202
        %p336 = pneg %p199
        %p337 = pneg %p223
        %p338 = pneg %p220
        %s340 = sld [smem:[#allocation8]]
        %s341 = smul.u32 %s39, 8
        %p342 = scmp.eq.s32.totalorder %s39, 0
        // Predicated region
        $region65: #{tpu_custom_call.1} parent=51 // pred_check
          %p343 = pneg %p342
        $region66: #{tpu_custom_call.1} parent=51 // pred_check_branch
          %345 = sbr.rel (%p343) target = $region68
        $region67: #{tpu_custom_call.1} parent=51 // pred_region
          %346 = vst [vmem:[#allocation2] sm:$0xff] 0.0
        $region68: #{tpu_custom_call.1} parent=51 // pred_fallthru
          _
        %s347 = scalar_lea.vmem %s3, %s341
        %v348 = vld [vmem:[%s347] sm:$0xff]
        %v349 = vpack.c.bf16 %v348, %v348
        %v350 = vld [vmem:[%s5] sm:$0x1]
        %v351 = vld [vmem:[%s6] sm:$0x1]
        %v353 = vperm.slane %v351, 0
        %vm355 = vcmask 15360
        %v357 = vsel %vm355, %v349, 0
        %vm359 = vcmask 1040384
        %v361 = vsel %vm359, %v350, 0
        %363 = vmatpush.bf16.msra.mxu0 0
        %364 = vmatpush.bf16.msra.mxu0 0
        %365 = vmatpush.bf16.msra.mxu0 0
        %366 = vmatpush.bf16.msra.mxu0 0
        %367 = vmatpush.bf16.msra.mxu0 0
        %368 = vmatpush.bf16.msra.mxu0 0
        %369 = vmatpush.bf16.msra.mxu0 0
        %370 = vmatpush.bf16.msra.mxu0 %v361
        %371 = vmatmul.bf16.gmra.mxu0 %v357
        %v372 = vpop.f32.mrf.mxu0
        %v373 = vadd.f32 %v353, %v372
        %v374 = vpop.f32.mrf.mxu0
        %375 = vdwg.mxu0
        %v376 = vmax.f32 %v373, 0.0
        %v377 = vpack.c.bf16 %v376, %v376
        %s378 = sld [smem:[#allocation6 + %s341]]
        %s379 = scalar_lea.vmem %s4, %s378
        %v380 = vld [vmem:[%s379] sm:$0x1]
        %381 = vst [vmem:[#allocation3] sm:$0x1] %v380
        %s382 = sadd.s32 %s341, 1
        %s383 = sld [smem:[#allocation6 + %s382]]
        %s384 = scalar_lea.vmem %s4, %s383
        %v385 = vld [vmem:[%s384] sm:$0x1]
        %386 = vst [vmem:[#allocation3 + $0x1] sm:$0x1] %v385
        %s387 = sadd.s32 %s341, 2
        %s388 = sld [smem:[#allocation6 + %s387]]
        %s389 = scalar_lea.vmem %s4, %s388
        %v390 = vld [vmem:[%s389] sm:$0x1]
        %391 = vst [vmem:[#allocation3 + $0x2] sm:$0x1] %v390
        %s392 = sadd.s32 %s341, 3
        %s393 = sld [smem:[#allocation6 + %s392]]
        %s394 = scalar_lea.vmem %s4, %s393
        %v395 = vld [vmem:[%s394] sm:$0x1]
        %396 = vst [vmem:[#allocation3 + $0x3] sm:$0x1] %v395
        %s397 = sadd.s32 %s341, 4
        %s398 = sld [smem:[#allocation6 + %s397]]
        %s399 = scalar_lea.vmem %s4, %s398
        %v400 = vld [vmem:[%s399] sm:$0x1]
        %401 = vst [vmem:[#allocation3 + $0x4] sm:$0x1] %v400
        %s402 = sadd.s32 %s341, 5
        %s403 = sld [smem:[#allocation6 + %s402]]
        %s404 = scalar_lea.vmem %s4, %s403
        %v405 = vld [vmem:[%s404] sm:$0x1]
        %406 = vst [vmem:[#allocation3 + $0x5] sm:$0x1] %v405
        %s407 = sadd.s32 %s341, 6
        %s408 = sld [smem:[#allocation6 + %s407]]
        %s409 = scalar_lea.vmem %s4, %s408
        %v410 = vld [vmem:[%s409] sm:$0x1]
        %411 = vst [vmem:[#allocation3 + $0x6] sm:$0x1] %v410
        %s412 = sadd.s32 %s341, 7
        %s413 = sld [smem:[#allocation6 + %s412]]
        %s414 = scalar_lea.vmem %s4, %s413
        %v415 = vld [vmem:[%s414] sm:$0x1]
        %416 = vst [vmem:[#allocation3 + $0x7] sm:$0x1] %v415
        %v417 = vld [vmem:[#allocation3] sm:$0xff]
        %v418 = vpack.c.bf16 %v417, %v417
        %v419 = vld [vmem:[#allocation9] sm:$0xff]
        %v420 = vld [vmem:[#allocation9 + $0x8] sm:$0xff]
        %v421 = vld [vmem:[#allocation9 + $0x10] sm:$0xff]
        %v422 = vld [vmem:[#allocation9 + $0x18] sm:$0xff]
        %v423 = vld [vmem:[#allocation9 + $0x20] sm:$0xff]
        %v424 = vld [vmem:[#allocation9 + $0x28] sm:$0xff]
        %v425 = vld [vmem:[#allocation9 + $0x30] sm:$0xff]
        %v426 = vld [vmem:[#allocation9 + $0x38] sm:$0xff]
        %v427 = vld [vmem:[#allocation9 + $0x40] sm:$0xff]
        %v428 = vld [vmem:[#allocation9 + $0x48] sm:$0xff]
        %v429 = vld [vmem:[#allocation9 + $0x50] sm:$0xff]
        %v430 = vld [vmem:[#allocation9 + $0x58] sm:$0xff]
        %v431 = vld [vmem:[#allocation9 + $0x60] sm:$0xff]
        %v432 = vld [vmem:[#allocation9 + $0x68] sm:$0xff]
        %v433 = vld [vmem:[#allocation9 + $0x70] sm:$0xff]
        %v434 = vld [vmem:[#allocation9 + $0x78] sm:$0xff]
        %v435 = vld [vmem:[#allocation9 + $0x80] sm:$0xff]
        %v436 = vld [vmem:[#allocation9 + $0x88] sm:$0xff]
        %v437 = vld [vmem:[#allocation9 + $0x90] sm:$0xff]
        %v438 = vld [vmem:[#allocation9 + $0x98] sm:$0xff]
        %v439 = vld [vmem:[#allocation9 + $0xa0] sm:$0xff]
        %v440 = vld [vmem:[#allocation9 + $0xa8] sm:$0xff]
        %v441 = vld [vmem:[#allocation9 + $0xb0] sm:$0xff]
        %v442 = vld [vmem:[#allocation9 + $0xb8] sm:$0xff]
        %v443 = vld [vmem:[#allocation9 + $0xc0] sm:$0xff]
        %v444 = vld [vmem:[#allocation9 + $0xc8] sm:$0xff]
        %v445 = vld [vmem:[#allocation9 + $0xd0] sm:$0xff]
        %v446 = vld [vmem:[#allocation9 + $0xd8] sm:$0xff]
        %v447 = vld [vmem:[#allocation9 + $0xe0] sm:$0xff]
        %v448 = vld [vmem:[#allocation9 + $0xe8] sm:$0xff]
        %v449 = vld [vmem:[#allocation9 + $0xf0] sm:$0xff]
        %v450 = vld [vmem:[#allocation9 + $0xf8] sm:$0xff]
        %v483 = vunpack.c.l.b16 %v419
        %v484 = vunpack.c.h.b16 %v419
        %v485 = vunpack.c.l.b16 %v420
        %v486 = vunpack.c.h.b16 %v420
        %v487 = vunpack.c.l.b16 %v421
        %v488 = vunpack.c.h.b16 %v421
        %v489 = vunpack.c.l.b16 %v422
        %v490 = vunpack.c.h.b16 %v422
        %v491 = vunpack.c.l.b16 %v423
        %v492 = vunpack.c.h.b16 %v423
        %v493 = vunpack.c.l.b16 %v424
        %v494 = vunpack.c.h.b16 %v424
        %v495 = vunpack.c.l.b16 %v425
        %v496 = vunpack.c.h.b16 %v425
        %v497 = vunpack.c.l.b16 %v426
        %v498 = vunpack.c.h.b16 %v426
        %v499 = vunpack.c.l.b16 %v427
        %v500 = vunpack.c.h.b16 %v427
        %v501 = vunpack.c.l.b16 %v428
        %v502 = vunpack.c.h.b16 %v428
        %v503 = vunpack.c.l.b16 %v429
        %v504 = vunpack.c.h.b16 %v429
        %v505 = vunpack.c.l.b16 %v430
        %v506 = vunpack.c.h.b16 %v430
        %v507 = vunpack.c.l.b16 %v431
        %v508 = vunpack.c.h.b16 %v431
        %v509 = vunpack.c.l.b16 %v432
        %v510 = vunpack.c.h.b16 %v432
        %v511 = vunpack.c.l.b16 %v433
        %v512 = vunpack.c.h.b16 %v433
        %v513 = vunpack.c.l.b16 %v434
        %v514 = vunpack.c.h.b16 %v434
        %v515 = vunpack.c.l.b16 %v435
        %v516 = vunpack.c.h.b16 %v435
        %v517 = vunpack.c.l.b16 %v436
        %v518 = vunpack.c.h.b16 %v436
        %v519 = vunpack.c.l.b16 %v437
        %v520 = vunpack.c.h.b16 %v437
        %v521 = vunpack.c.l.b16 %v438
        %v522 = vunpack.c.h.b16 %v438
        %v523 = vunpack.c.l.b16 %v439
        %v524 = vunpack.c.h.b16 %v439
        %v525 = vunpack.c.l.b16 %v440
        %v526 = vunpack.c.h.b16 %v440
        %v527 = vunpack.c.l.b16 %v441
        %v528 = vunpack.c.h.b16 %v441
        %v529 = vunpack.c.l.b16 %v442
        %v530 = vunpack.c.h.b16 %v442
        %v531 = vunpack.c.l.b16 %v443
        %v532 = vunpack.c.h.b16 %v443
        %v533 = vunpack.c.l.b16 %v444
        %v534 = vunpack.c.h.b16 %v444
        %v535 = vunpack.c.l.b16 %v445
        %v536 = vunpack.c.h.b16 %v445
        %v537 = vunpack.c.l.b16 %v446
        %v538 = vunpack.c.h.b16 %v446
        %v539 = vunpack.c.l.b16 %v447
        %v540 = vunpack.c.h.b16 %v447
        %v541 = vunpack.c.l.b16 %v448
        %v542 = vunpack.c.h.b16 %v448
        %v543 = vunpack.c.l.b16 %v449
        %v544 = vunpack.c.h.b16 %v449
        %v545 = vunpack.c.l.b16 %v450
        %v546 = vunpack.c.h.b16 %v450
        %v547 = vpack.c.b16 %v487, %v483
        %v548 = vpack.c.b16 %v488, %v484
        %v549 = vpack.c.b16 %v489, %v485
        %v550 = vpack.c.b16 %v490, %v486
        %v551 = vpack.c.b16 %v495, %v491
        %v552 = vpack.c.b16 %v496, %v492
        %v553 = vpack.c.b16 %v497, %v493
        %v554 = vpack.c.b16 %v498, %v494
        %v555 = vpack.c.b16 %v503, %v499
        %v556 = vpack.c.b16 %v504, %v500
        %v557 = vpack.c.b16 %v505, %v501
        %v558 = vpack.c.b16 %v506, %v502
        %v559 = vpack.c.b16 %v511, %v507
        %v560 = vpack.c.b16 %v512, %v508
        %v561 = vpack.c.b16 %v513, %v509
        %v562 = vpack.c.b16 %v514, %v510
        %v563 = vpack.c.b16 %v519, %v515
        %v564 = vpack.c.b16 %v520, %v516
        %v565 = vpack.c.b16 %v521, %v517
        %v566 = vpack.c.b16 %v522, %v518
        %v567 = vpack.c.b16 %v527, %v523
        %v568 = vpack.c.b16 %v528, %v524
        %v569 = vpack.c.b16 %v529, %v525
        %v570 = vpack.c.b16 %v530, %v526
        %v571 = vpack.c.b16 %v535, %v531
        %v572 = vpack.c.b16 %v536, %v532
        %v573 = vpack.c.b16 %v537, %v533
        %v574 = vpack.c.b16 %v538, %v534
        %v575 = vpack.c.b16 %v543, %v539
        %v576 = vpack.c.b16 %v544, %v540
        %v577 = vpack.c.b16 %v545, %v541
        %v578 = vpack.c.b16 %v546, %v542
        %611 = vmatpush.bf16.msra.mxu0 %v575
        %612 = vmatpush.bf16.msra.mxu0 %v571
        %613 = vmatpush.bf16.msra.mxu0 %v567
        %614 = vmatpush.bf16.msra.mxu0 %v563
        %615 = vmatpush.bf16.msra.mxu0 %v559
        %616 = vmatpush.bf16.msra.mxu0 %v555
        %617 = vmatpush.bf16.msra.mxu0 %v551
        %618 = vmatpush.bf16.msra.mxu0 %v547
        %619 = vmatmul.bf16.gmra.mxu0 %v377
        %v620 = vpop.f32.mrf.mxu0
        %v621 = vadd.f32 0.0, %v620
        %v622 = vpop.f32.mrf.mxu0
        %623 = vdwg.mxu0
        %624 = vmatpush.bf16.msra.mxu0 %v576
        %625 = vmatpush.bf16.msra.mxu0 %v572
        %626 = vmatpush.bf16.msra.mxu0 %v568
        %627 = vmatpush.bf16.msra.mxu0 %v564
        %628 = vmatpush.bf16.msra.mxu0 %v560
        %629 = vmatpush.bf16.msra.mxu0 %v556
        %630 = vmatpush.bf16.msra.mxu0 %v552
        %631 = vmatpush.bf16.msra.mxu0 %v548
        %632 = vmatmul.bf16.gmra.mxu0 %v377
        %v633 = vpop.f32.mrf.mxu0
        %v634 = vadd.f32 0.0, %v633
        %v635 = vpop.f32.mrf.mxu0
        %636 = vdwg.mxu0
        %637 = vmatpush.bf16.msra.mxu0 %v577
        %638 = vmatpush.bf16.msra.mxu0 %v573
        %639 = vmatpush.bf16.msra.mxu0 %v569
        %640 = vmatpush.bf16.msra.mxu0 %v565
        %641 = vmatpush.bf16.msra.mxu0 %v561
        %642 = vmatpush.bf16.msra.mxu0 %v557
        %643 = vmatpush.bf16.msra.mxu0 %v553
        %644 = vmatpush.bf16.msra.mxu0 %v549
        %645 = vmatmul.bf16.gmra.mxu0 %v377
        %v646 = vpop.f32.mrf.mxu0
        %v647 = vadd.f32 0.0, %v646
        %v648 = vpop.f32.mrf.mxu0
        %649 = vdwg.mxu0
        %650 = vmatpush.bf16.msra.mxu0 %v578
        %651 = vmatpush.bf16.msra.mxu0 %v574
        %652 = vmatpush.bf16.msra.mxu0 %v570
        %653 = vmatpush.bf16.msra.mxu0 %v566
        %654 = vmatpush.bf16.msra.mxu0 %v562
        %655 = vmatpush.bf16.msra.mxu0 %v558
        %656 = vmatpush.bf16.msra.mxu0 %v554
        %657 = vmatpush.bf16.msra.mxu0 %v550
        %658 = vmatmul.bf16.gmra.mxu0 %v377
        %v659 = vpop.f32.mrf.mxu0
        %v660 = vadd.f32 0.0, %v659
        %v661 = vpop.f32.mrf.mxu0
        %662 = vdwg.mxu0
        %v663 = vld [vmem:[#allocation12] sm:$0xf]
        %v664 = vld [vmem:[#allocation12 + $0x4] sm:$0xf]
        %v665 = vld [vmem:[#allocation12 + $0x8] sm:$0xf]
        %v666 = vld [vmem:[#allocation12 + $0xc] sm:$0xf]
        %v667 = vld [vmem:[#allocation12 + $0x10] sm:$0xf]
        %v668 = vld [vmem:[#allocation12 + $0x14] sm:$0xf]
        %v669 = vld [vmem:[#allocation12 + $0x18] sm:$0xf]
        %v670 = vld [vmem:[#allocation12 + $0x1c] sm:$0xf]
        %v671 = vld [vmem:[#allocation12 + $0x20] sm:$0xf]
        %v672 = vld [vmem:[#allocation12 + $0x24] sm:$0xf]
        %v673 = vld [vmem:[#allocation12 + $0x28] sm:$0xf]
        %v674 = vld [vmem:[#allocation12 + $0x2c] sm:$0xf]
        %v675 = vld [vmem:[#allocation12 + $0x30] sm:$0xf]
        %v676 = vld [vmem:[#allocation12 + $0x34] sm:$0xf]
        %v677 = vld [vmem:[#allocation12 + $0x38] sm:$0xf]
        %v678 = vld [vmem:[#allocation12 + $0x3c] sm:$0xf]
        %680 = vset.pattern.permute.xlu0 0
        %681 = vperm.xlu0 %680, %v417
        %v682 = vpop.permute.xlu0 %681
        %v684 = vmul.f32 %v682, %v621
        %v701 = vunpack.c.l.b16 %v663
        %v702 = vunpack.c.l.b16 %v664
        %v703 = vunpack.c.l.b16 %v665
        %v704 = vunpack.c.l.b16 %v666
        %v705 = vunpack.c.l.b16 %v667
        %v706 = vunpack.c.l.b16 %v668
        %v707 = vunpack.c.l.b16 %v669
        %v708 = vunpack.c.l.b16 %v670
        %v709 = vunpack.c.l.b16 %v671
        %v710 = vunpack.c.l.b16 %v672
        %v711 = vunpack.c.l.b16 %v673
        %v712 = vunpack.c.l.b16 %v674
        %v713 = vunpack.c.l.b16 %v675
        %v714 = vunpack.c.l.b16 %v676
        %v715 = vunpack.c.l.b16 %v677
        %v716 = vunpack.c.l.b16 %v678
        %v717 = vpack.c.b16 %v702, %v701
        %v718 = vpack.c.b16 %v704, %v703
        %v719 = vpack.c.b16 %v706, %v705
        %v720 = vpack.c.b16 %v708, %v707
        %v721 = vpack.c.b16 %v710, %v709
        %v722 = vpack.c.b16 %v712, %v711
        %v723 = vpack.c.b16 %v714, %v713
        %v724 = vpack.c.b16 %v716, %v715
        %733 = vmatpush.bf16.msra.mxu0 %v724
        %734 = vmatpush.bf16.msra.mxu0 %v723
        %735 = vmatpush.bf16.msra.mxu0 %v722
        %736 = vmatpush.bf16.msra.mxu0 %v721
        %737 = vmatpush.bf16.msra.mxu0 %v720
        %738 = vmatpush.bf16.msra.mxu0 %v719
        %739 = vmatpush.bf16.msra.mxu0 %v718
        %740 = vmatpush.bf16.msra.mxu0 %v717
        %741 = vmatmul.bf16.gmra.mxu0 %v418
        %v742 = vpop.f32.mrf.mxu0
        %v743 = vadd.f32 %v684, %v742
        %v744 = vpop.f32.mrf.mxu0
        %745 = vdwg.mxu0
        %746 = vset.pattern.permute.xlu0 1
        %747 = vperm.xlu0 %746, %v417
        %v748 = vpop.permute.xlu0 %747
        %v750 = vmul.f32 %v748, %v634
        %v751 = vadd.f32 %v743, %v750
        %752 = vset.pattern.permute.xlu0 2
        %753 = vperm.xlu0 %752, %v417
        %v754 = vpop.permute.xlu0 %753
        %v756 = vmul.f32 %v754, %v647
        %v757 = vadd.f32 %v751, %v756
        %758 = vset.pattern.permute.xlu0 3
        %759 = vperm.xlu0 %758, %v417
        %v760 = vpop.permute.xlu0 %759
        %v762 = vmul.f32 %v760, %v660
        %v763 = vadd.f32 %v757, %v762
        %764 = vst [vmem:[#allocation4] sm:$0xff] %v763
        %s765 = ssub.s32 %s340, %s341
        %p766 = scmp.gt.s32.totalorder %s765, 0
        %s767 = scalar_select %p766, %s765, 0
        %p768 = scmp.lt.s32.totalorder %s767, 8
        %s769 = scalar_select %p768, %s767, 8
        // While loop
        $region69: #{tpu_custom_call.1} parent=51 // loop_pre_header
          _
        $region70: #{tpu_custom_call.1} parent=51 // loop_header
          %s771 = sphi 0, %s773
          %p772 = scmp.ge.s32.totalorder %s771, %s769
        $region71: #{tpu_custom_call.1} parent=51 // loop_header_branch
          %775 = sbr.rel (%p772) target = $region75
        $region72: #{tpu_custom_call.1} parent=51 // loop_body
          %s776 = sadd.s32 %s341, %s771
          %s777 = sld [smem:[#allocation7 + %s776]]
          %s778 = scalar_lea.vmem [#allocation2], %s777
          %v779 = vld [vmem:[%s778] sm:$0x1]
          %s780 = scalar_lea.vmem [#allocation4], %s771
          %v781 = vld [vmem:[%s780] sm:$0x1]
          %v782 = vadd.f32 %v779, %v781
          %783 = vst [vmem:[%s778] sm:$0x1] %v782
        $region73: #{tpu_custom_call.1} parent=51 // loop_footer
          %s773 = sadd.s32 %s771, 1
        $region74: #{tpu_custom_call.1} parent=51 // loop_footer_branch
          %770 = sbr.rel target = $region70
        $region75: #{tpu_custom_call.1} parent=51 // loop_exit
          _
        %p784 = scmp.eq.s32.totalorder %s39, 1
        // Predicated region
        $region76: #{tpu_custom_call.1} parent=51 // pred_check
          %p785 = pneg %p784
        $region77: #{tpu_custom_call.1} parent=51 // pred_check_branch
          %787 = sbr.rel (%p785) target = $region79
        $region78: #{tpu_custom_call.1} parent=51 // pred_region
          %v788 = vld [vmem:[%s4] sm:$0xff]
          %v789 = vpack.c.bf16 %v788, %v788
          %v790 = vld [vmem:[#allocation2] sm:$0xff]
          %v791 = vld [vmem:[#allocation14] sm:$0xf]
          %v792 = vld [vmem:[#allocation14 + $0x4] sm:$0xf]
          %v793 = vld [vmem:[#allocation14 + $0x8] sm:$0xf]
          %v794 = vld [vmem:[#allocation14 + $0xc] sm:$0xf]
          %v795 = vld [vmem:[#allocation14 + $0x10] sm:$0xf]
          %v796 = vld [vmem:[#allocation14 + $0x14] sm:$0xf]
          %v797 = vld [vmem:[#allocation14 + $0x18] sm:$0xf]
          %v798 = vld [vmem:[#allocation14 + $0x1c] sm:$0xf]
          %v799 = vld [vmem:[#allocation14 + $0x20] sm:$0xf]
          %v800 = vld [vmem:[#allocation14 + $0x24] sm:$0xf]
          %v801 = vld [vmem:[#allocation14 + $0x28] sm:$0xf]
          %v802 = vld [vmem:[#allocation14 + $0x2c] sm:$0xf]
          %v803 = vld [vmem:[#allocation14 + $0x30] sm:$0xf]
          %v804 = vld [vmem:[#allocation14 + $0x34] sm:$0xf]
          %v805 = vld [vmem:[#allocation14 + $0x38] sm:$0xf]
          %v806 = vld [vmem:[#allocation14 + $0x3c] sm:$0xf]
          %v823 = vunpack.c.l.b16 %v791
          %v824 = vunpack.c.l.b16 %v792
          %v825 = vunpack.c.l.b16 %v793
          %v826 = vunpack.c.l.b16 %v794
          %v827 = vunpack.c.l.b16 %v795
          %v828 = vunpack.c.l.b16 %v796
          %v829 = vunpack.c.l.b16 %v797
          %v830 = vunpack.c.l.b16 %v798
          %v831 = vunpack.c.l.b16 %v799
          %v832 = vunpack.c.l.b16 %v800
          %v833 = vunpack.c.l.b16 %v801
          %v834 = vunpack.c.l.b16 %v802
          %v835 = vunpack.c.l.b16 %v803
          %v836 = vunpack.c.l.b16 %v804
          %v837 = vunpack.c.l.b16 %v805
          %v838 = vunpack.c.l.b16 %v806
          %v839 = vpack.c.b16 %v824, %v823
          %v840 = vpack.c.b16 %v826, %v825
          %v841 = vpack.c.b16 %v828, %v827
          %v842 = vpack.c.b16 %v830, %v829
          %v843 = vpack.c.b16 %v832, %v831
          %v844 = vpack.c.b16 %v834, %v833
          %v845 = vpack.c.b16 %v836, %v835
          %v846 = vpack.c.b16 %v838, %v837
          %855 = vmatpush.bf16.msra.mxu0 %v846
          %856 = vmatpush.bf16.msra.mxu0 %v845
          %857 = vmatpush.bf16.msra.mxu0 %v844
          %858 = vmatpush.bf16.msra.mxu0 %v843
          %859 = vmatpush.bf16.msra.mxu0 %v842
          %860 = vmatpush.bf16.msra.mxu0 %v841
          %861 = vmatpush.bf16.msra.mxu0 %v840
          %862 = vmatpush.bf16.msra.mxu0 %v839
          %863 = vmatmul.bf16.gmra.mxu0 %v789
          %v864 = vpop.f32.mrf.mxu0
          %v865 = vadd.f32 0.0, %v864
          %v866 = vpop.f32.mrf.mxu0
          %867 = vdwg.mxu0
          %v868 = vadd.f32 %v790, %v865
          %v869 = vld [vmem:[%s10] sm:$0x1]
          %v871 = vperm.slane %v869, 0
          %v873 = vadd.f32 %v868, %v871
          %v874 = vxor.u32 %v873, 2147483648
          %v875 = vmul.f32 %v874, 1.442695
          %v876 = vpow.pop %v875
          %v877 = vadd.f32 %v876, 1.0
          %v878 = vrcp.pop %v877
          %v879 = vmul.f32 %v877, %v878
          %v880 = vsub.f32 1.0, %v879
          %v881 = vmul.f32 %v878, %v880
          %v882 = vadd.f32 %v878, %v881
          %vm883 = vweird.f32 %v877
          %vm884 = vweird.f32 %v878
          %vm885 = vmor %vm883, %vm884
          %v886 = vsel %vm885, %v878, %v882
          %v887 = vand.u32 2147483647, %v877
          %vm888 = vcmp.eq.f32.partialorder %v887, 8.507059e+37
          %v889 = vand.u32 %v877, 2147483648
          %v890 = vor.u32 1.1754944e-38, %v889
          %v891 = vsel %vm888, %v890, %v886
          %v892 = vmul.f32 1.0, %v891
          %893 = vst [vmem:[#allocation15] sm:$0xff] %v892
        $region79: #{tpu_custom_call.1} parent=51 // pred_fallthru
          _
        // Predicated region
        $region80: #{tpu_custom_call.1} parent=51 // pred_check
          %p894 = pneg %p220
        $region81: #{tpu_custom_call.1} parent=51 // pred_check_branch
          %896 = sbr.rel (%p894) target = $region83
        $region82: #{tpu_custom_call.1} parent=51 // pred_region
          %898 = vsyncadd [#allocation11], 0
          %s900 = sshll.u32 [#allocation15], 4
          %s901 = int_to_ptr.vmem [resolvable:$true] %s900
          %s902 = sshll.u32 %s11, 4
          %s903 = int_to_ptr.hbm [resolvable:$true] %s902
          %905 = dma.vmem_to_hbm [thread:$0]  %s901, 128, %s903, [#allocation11]
        $region83: #{tpu_custom_call.1} parent=51 // pred_fallthru
          _
        // Predicated region
        $region84: #{tpu_custom_call.1} parent=51 // pred_check
          %p906 = pneg %p220
        $region85: #{tpu_custom_call.1} parent=51 // pred_check_branch
          %908 = sbr.rel (%p906) target = $region87
        $region86: #{tpu_custom_call.1} parent=51 // pred_region
          %910 = dma.done [#allocation11], 128
        $region87: #{tpu_custom_call.1} parent=51 // pred_fallthru
          _
      $region52: #{tpu_custom_call.1} parent=5 // pred_fallthru
        _
      %p911 = scmp.le.s32.totalorder 2, %s34
      // Predicated region
      $region88: #{tpu_custom_call.1} parent=5 // pred_check
        %p912 = pneg %p911
      $region89: #{tpu_custom_call.1} parent=5 // pred_check_branch
        %914 = sbr.rel (%p912) target = $region91
      $region90: #{tpu_custom_call.1} parent=5 // pred_region
        %s915 = ssub.s32 %s34, 2
      $region91: #{tpu_custom_call.1} parent=5 // pred_fallthru
        _
    $region6: #{tpu_custom_call.1} parent=1 // loop_footer
      %s38 = sadd.s32 1, %s34
    $region7: #{tpu_custom_call.1} parent=1 // loop_footer_branch
      %33 = sbr.rel target = $region3
    $region8: #{tpu_custom_call.1} parent=1 // loop_exit
      _
    %916 = vsyncpa [#allocation10], 1
    %s917 = scalar_lea.sflag [#allocation10], 1
    %918 = vsyncpa %s917, 1
    %919 = vsyncpa [#allocation13], 1
    %920 = vsyncpa [#allocation11], 1
    %s921 = scalar_lea.sflag [#allocation11], 1
    %922 = vsyncpa %s921, 1

</llo_original>
